<compile_context>
chip_gen: v5e
topology: v5e:2x2
jax: 0.10.0
libtpu: 0.0.40
codegen_flags: <defaults>
</compile_context>

<pallas_src>
import functools

import jax
import jax.numpy as jnp
from jax.experimental import pallas as pl
from jax.experimental.pallas import tpu as pltpu

INPUT_SIZE = 42   # Connect Four board: 6 * 7
H1, H2, OUT = 64, 32, 7


def mlp_softmax_kernel(x_ref, w1_ref, b1_ref, w2_ref, b2_ref, w3_ref, b3_ref,
                       o_ref):
    """Fused 3-layer MLP + row softmax on one (TB, 42) batch tile."""
    x = x_ref[...]                                               # (TB, 42) bf16

    # Layer 1: Linear(42 -> 64) + ReLU   (Dropout = identity in eval)
    h1 = jnp.dot(x, w1_ref[...], preferred_element_type=jnp.float32)
    h1 = jnp.maximum(h1 + b1_ref[...], 0.0)                      # (TB, 64) f32

    # Layer 2: Linear(64 -> 32) + ReLU   (Dropout = identity in eval)
    h2 = jnp.dot(h1.astype(jnp.bfloat16), w2_ref[...],
                 preferred_element_type=jnp.float32)
    h2 = jnp.maximum(h2 + b2_ref[...], 0.0)                      # (TB, 32) f32

    # Layer 3: Linear(32 -> 7)
    logits = jnp.dot(h2.astype(jnp.bfloat16), w3_ref[...],
                     preferred_element_type=jnp.float32)
    logits = logits + b3_ref[...]                                # (TB, 7) f32

    # Numerically stable softmax along the feature axis.  Exact divide:
    # it is pure slack here and keeps row sums == 1 to f32 precision.
    m = jnp.max(logits, axis=-1, keepdims=True)
    e = jnp.exp(logits - m)
    o_ref[...] = e / jnp.sum(e, axis=-1, keepdims=True)


def _round_up(n: int, m: int) -> int:
    return ((n + m - 1) // m) * m


@functools.partial(jax.jit, static_argnames=("tile_b",))
def simple_policy_network(x, params, tile_b: int = 4096):
    """x (B, 42) -> action probabilities (B, 7) float32."""
    w1, b1, w2, b2, w3, b3 = params
    B, F = x.shape

    # bf16 activations / weights (f32 accumulation inside the kernel).
    # For minimum HBM traffic the caller should already hold x in bf16;
    # Connect Four board entries are exactly representable either way.
    if x.dtype != jnp.bfloat16:
        x = x.astype(jnp.bfloat16)
    w1 = w1.astype(jnp.bfloat16)
    w2 = w2.astype(jnp.bfloat16)
    w3 = w3.astype(jnp.bfloat16)
    b1 = b1.astype(jnp.float32)
    b2 = b2.astype(jnp.float32)
    b3 = b3.astype(jnp.float32)

    # Batch tile: multiple of 8 sublanes, capped at tile_b, and capped so the
    # grid has >=2 steps when possible (lets "parallel" shard across the two
    # TensorCores on v7x).  Ragged tails are handled by Pallas partial-tile
    # masking, so no pad/slice pass over x is needed.
    TB = min(tile_b, _round_up(pl.cdiv(B, 2), 8))
    grid = (pl.cdiv(B, TB),)

    # VMEM budget: blocks are lane-padded to 128 in VMEM and double-buffered.
    lane = lambda n: _round_up(n, 128)
    blk_bytes = 2 * TB * lane(F) * 2 + 2 * TB * lane(OUT) * 4   # x bf16 + out f32
    vmem_limit = int(min(48 << 20, max(32 << 20, 2 * blk_bytes + (4 << 20))))

    out = pl.pallas_call(
        mlp_softmax_kernel,
        out_shape=jax.ShapeDtypeStruct((B, OUT), jnp.float32),
        grid=grid,
        in_specs=[
            pl.BlockSpec((TB, F), lambda i: (i, 0)),     # x: tiled over batch
            pl.BlockSpec((F, H1), lambda i: (0, 0)),     # w1: resident
            pl.BlockSpec((1, H1), lambda i: (0, 0)),     # b1
            pl.BlockSpec((H1, H2), lambda i: (0, 0)),    # w2
            pl.BlockSpec((1, H2), lambda i: (0, 0)),     # b2
            pl.BlockSpec((H2, OUT), lambda i: (0, 0)),   # w3
            pl.BlockSpec((1, OUT), lambda i: (0, 0)),    # b3
        ],
        out_specs=pl.BlockSpec((TB, OUT), lambda i: (i, 0)),
        compiler_params=pltpu.CompilerParams(
            dimension_semantics=("parallel",),           # megacore on v7x
            vmem_limit_bytes=vmem_limit),
    )(x, w1, b1, w2, b2, w3, b3)

    return out


def init_params(key, input_size: int = INPUT_SIZE):
    """Deterministic init mirroring nn.Linear's U(-1/sqrt(fan_in), +1/sqrt(fan_in)).

    Weights stored as (in, out) so the kernel can do x @ W directly.
    Kept in f32 here (module semantics); the wrapper casts weights to bf16.
    """
    dims = [(input_size, H1), (H1, H2), (H2, OUT)]
    params = []
    for fan_in, fan_out in dims:
        key, kw, kb = jax.random.split(key, 3)
        bound = 1.0 / jnp.sqrt(fan_in)
        w = jax.random.uniform(kw, (fan_in, fan_out), jnp.float32, -bound, bound)
        b = jax.random.uniform(kb, (1, fan_out), jnp.float32, -bound, bound)
        params += [w, b]
    return tuple(params)


def reference_forward(x, params):
    """Pure-JAX f32 reference (eval mode: dropout = identity)."""
    w1, b1, w2, b2, w3, b3 = params
    h1 = jnp.maximum(x @ w1 + b1, 0.0)
    h2 = jnp.maximum(h1 @ w2 + b2, 0.0)
    logits = h2 @ w3 + b3
    return jax.nn.softmax(logits, axis=1)


if __name__ == "__main__":
    key = jax.random.PRNGKey(0)
    key, kx1, kx2 = jax.random.split(key, 3)
    params = init_params(key, INPUT_SIZE)

    # Small primary test (batch = 2): single grid step with a partial tile.
    B = 2
    x = jax.random.normal(kx1, (B, INPUT_SIZE), dtype=jnp.float32)
    out = jax.block_until_ready(simple_policy_network(x, params))
    ref = reference_forward(x, params)
    assert out.shape == (B, OUT)
    # bf16 storage of x / weights => small deviation from the f32 reference.
    assert bool(jnp.allclose(out, ref, atol=8e-3, rtol=1e-2))
    # Exact softmax normalization: rows sum to 1 tightly.
    assert bool(jnp.allclose(jnp.sum(out, axis=1), 1.0, atol=1e-4))

    # Multi-tile test with a ragged tail: 1000 rows, TB=256 -> grid of 4,
    # last tile partially out of bounds (masked reads/writes).
    B2 = 1000
    x2 = jax.random.normal(kx2, (B2, INPUT_SIZE), dtype=jnp.float32)
    out2 = jax.block_until_ready(simple_policy_network(x2, params, tile_b=256))
    ref2 = reference_forward(x2, params)
    assert out2.shape == (B2, OUT)
    assert bool(jnp.allclose(out2, ref2, atol=8e-3, rtol=1e-2))
    assert bool(jnp.allclose(jnp.sum(out2, axis=1), 1.0, atol=1e-4))

    print("KERNEL_OK")
</pallas_src>

<mosaic_0001>
module attributes {stable_mosaic.version = 11 : i64} {
  func.func @mlp_softmax_kernel(%arg0: i32, %arg1: memref<8x42xbf16, #tpu.memory_space<vmem>>, %arg2: memref<42x64xbf16, #tpu.memory_space<vmem>>, %arg3: memref<1x64xf32, #tpu.memory_space<vmem>>, %arg4: memref<64x32xbf16, #tpu.memory_space<vmem>>, %arg5: memref<1x32xf32, #tpu.memory_space<vmem>>, %arg6: memref<32x7xbf16, #tpu.memory_space<vmem>>, %arg7: memref<1x7xf32, #tpu.memory_space<vmem>>, %arg8: memref<8x7xf32, #tpu.memory_space<vmem>>) attributes {dimension_semantics = [#tpu.dimension_semantics<parallel>], iteration_bounds = array<i64: 1>, scalar_prefetch = 0 : i64, scratch_operands = 0 : i64, tpu.core_type = #tpu.core_type<tc>, window_params = [{transform_indices = @transform_0, window_bounds = array<i64: 8, 42>}, {pipeline_mode = #tpu.pipeline_mode<synchronous>, transform_indices = @transform_1, window_bounds = array<i64: 42, 64>}, {pipeline_mode = #tpu.pipeline_mode<synchronous>, transform_indices = @transform_2, window_bounds = array<i64: 1, 64>}, {pipeline_mode = #tpu.pipeline_mode<synchronous>, transform_indices = @transform_3, window_bounds = array<i64: 64, 32>}, {pipeline_mode = #tpu.pipeline_mode<synchronous>, transform_indices = @transform_4, window_bounds = array<i64: 1, 32>}, {pipeline_mode = #tpu.pipeline_mode<synchronous>, transform_indices = @transform_5, window_bounds = array<i64: 32, 7>}, {pipeline_mode = #tpu.pipeline_mode<synchronous>, transform_indices = @transform_6, window_bounds = array<i64: 1, 7>}, {transform_indices = @transform_7, window_bounds = array<i64: 8, 7>}]} {
    %c0 = arith.constant 0 : index
    %c0_0 = arith.constant 0 : index
    %0 = vector.load %arg1[%c0, %c0_0] : memref<8x42xbf16, #tpu.memory_space<vmem>>, vector<8x42xbf16>
    %c0_1 = arith.constant 0 : index
    %c0_2 = arith.constant 0 : index
    %1 = vector.load %arg2[%c0_1, %c0_2] : memref<42x64xbf16, #tpu.memory_space<vmem>>, vector<42x64xbf16>
    %cst = arith.constant dense<0.000000e+00> : vector<8x64xf32>
    %2 = tpu.matmul %0, %1, %cst {dimension_numbers = #tpu.dot_dimension_numbers<[1], [0], [0], [1], [0, 0, 1, 1], [], []>} : vector<8x42xbf16>, vector<42x64xbf16>, vector<8x64xf32> -> vector<8x64xf32>
    %c0_3 = arith.constant 0 : index
    %c0_4 = arith.constant 0 : index
    %3 = vector.load %arg3[%c0_3, %c0_4] : memref<1x64xf32, #tpu.memory_space<vmem>>, vector<1x64xf32>
    %4 = vector.broadcast %3 : vector<1x64xf32> to vector<8x64xf32>
    %5 = arith.addf %2, %4 : vector<8x64xf32>
    %cst_5 = arith.constant 0.000000e+00 : f32
    %6 = vector.broadcast %cst_5 : f32 to vector<8x64xf32>
    %7 = arith.maximumf %5, %6 : vector<8x64xf32>
    %8 = arith.truncf %7 : vector<8x64xf32> to vector<8x64xbf16>
    %c0_6 = arith.constant 0 : index
    %c0_7 = arith.constant 0 : index
    %9 = vector.load %arg4[%c0_6, %c0_7] : memref<64x32xbf16, #tpu.memory_space<vmem>>, vector<64x32xbf16>
    %cst_8 = arith.constant dense<0.000000e+00> : vector<8x32xf32>
    %10 = tpu.matmul %8, %9, %cst_8 {dimension_numbers = #tpu.dot_dimension_numbers<[1], [0], [0], [1], [0, 0, 1, 1], [], []>} : vector<8x64xbf16>, vector<64x32xbf16>, vector<8x32xf32> -> vector<8x32xf32>
    %c0_9 = arith.constant 0 : index
    %c0_10 = arith.constant 0 : index
    %11 = vector.load %arg5[%c0_9, %c0_10] : memref<1x32xf32, #tpu.memory_space<vmem>>, vector<1x32xf32>
    %12 = vector.broadcast %11 : vector<1x32xf32> to vector<8x32xf32>
    %13 = arith.addf %10, %12 : vector<8x32xf32>
    %cst_11 = arith.constant 0.000000e+00 : f32
    %14 = vector.broadcast %cst_11 : f32 to vector<8x32xf32>
    %15 = arith.maximumf %13, %14 : vector<8x32xf32>
    %16 = arith.truncf %15 : vector<8x32xf32> to vector<8x32xbf16>
    %c0_12 = arith.constant 0 : index
    %c0_13 = arith.constant 0 : index
    %17 = vector.load %arg6[%c0_12, %c0_13] : memref<32x7xbf16, #tpu.memory_space<vmem>>, vector<32x7xbf16>
    %cst_14 = arith.constant dense<0.000000e+00> : vector<8x7xf32>
    %18 = tpu.matmul %16, %17, %cst_14 {dimension_numbers = #tpu.dot_dimension_numbers<[1], [0], [0], [1], [0, 0, 1, 1], [], []>} : vector<8x32xbf16>, vector<32x7xbf16>, vector<8x7xf32> -> vector<8x7xf32>
    %c0_15 = arith.constant 0 : index
    %c0_16 = arith.constant 0 : index
    %19 = vector.load %arg7[%c0_15, %c0_16] : memref<1x7xf32, #tpu.memory_space<vmem>>, vector<1x7xf32>
    %20 = vector.broadcast %19 : vector<1x7xf32> to vector<8x7xf32>
    %21 = arith.addf %18, %20 : vector<8x7xf32>
    %cst_17 = arith.constant dense<0xFF800000> : vector<8xf32>
    %22 = vector.multi_reduction <maximumf>, %21, %cst_17 [1] : vector<8x7xf32> to vector<8xf32>
    %23 = vector.shape_cast %22 : vector<8xf32> to vector<8x1xf32>
    %24 = vector.broadcast %23 : vector<8x1xf32> to vector<8x7xf32>
    %25 = arith.subf %21, %24 : vector<8x7xf32>
    %26 = math.exp %25 : vector<8x7xf32>
    %cst_18 = arith.constant dense<0.000000e+00> : vector<8xf32>
    %27 = vector.multi_reduction <add>, %26, %cst_18 [1] : vector<8x7xf32> to vector<8xf32>
    %28 = vector.shape_cast %27 : vector<8xf32> to vector<8x1xf32>
    %29 = vector.broadcast %28 : vector<8x1xf32> to vector<8x7xf32>
    %30 = arith.divf %26, %29 : vector<8x7xf32>
    %c0_19 = arith.constant 0 : index
    %c0_20 = arith.constant 0 : index
    %31 = vector.load %arg8[%c0_19, %c0_20] : memref<8x7xf32, #tpu.memory_space<vmem>>, vector<8x7xf32>
    tpu.vector_store %arg8[%c0_19, %c0_20], %30 {strides = array<i32>} : memref<8x7xf32, #tpu.memory_space<vmem>>, vector<8x7xf32>,
    return
  }
  func.func @transform_0(%arg0: i32) -> (i32, i32) {
    %c0_i32 = arith.constant 0 : i32
    %c0_i32_0 = arith.constant 0 : i32
    return %arg0, %c0_i32 : i32, i32
  }
  func.func @transform_1(%arg0: i32) -> (i32, i32) {
    %c0_i32 = arith.constant 0 : i32
    %c0_i32_0 = arith.constant 0 : i32
    %c0_i32_1 = arith.constant 0 : i32
    return %c0_i32, %c0_i32_0 : i32, i32
  }
  func.func @transform_2(%arg0: i32) -> (i32, i32) {
    %c0_i32 = arith.constant 0 : i32
    %c0_i32_0 = arith.constant 0 : i32
    %c0_i32_1 = arith.constant 0 : i32
    return %c0_i32, %c0_i32_0 : i32, i32
  }
  func.func @transform_3(%arg0: i32) -> (i32, i32) {
    %c0_i32 = arith.constant 0 : i32
    %c0_i32_0 = arith.constant 0 : i32
    %c0_i32_1 = arith.constant 0 : i32
    return %c0_i32, %c0_i32_0 : i32, i32
  }
  func.func @transform_4(%arg0: i32) -> (i32, i32) {
    %c0_i32 = arith.constant 0 : i32
    %c0_i32_0 = arith.constant 0 : i32
    %c0_i32_1 = arith.constant 0 : i32
    return %c0_i32, %c0_i32_0 : i32, i32
  }
  func.func @transform_5(%arg0: i32) -> (i32, i32) {
    %c0_i32 = arith.constant 0 : i32
    %c0_i32_0 = arith.constant 0 : i32
    %c0_i32_1 = arith.constant 0 : i32
    return %c0_i32, %c0_i32_0 : i32, i32
  }
  func.func @transform_6(%arg0: i32) -> (i32, i32) {
    %c0_i32 = arith.constant 0 : i32
    %c0_i32_0 = arith.constant 0 : i32
    %c0_i32_1 = arith.constant 0 : i32
    return %c0_i32, %c0_i32_0 : i32, i32
  }
  func.func @transform_7(%arg0: i32) -> (i32, i32) {
    %c0_i32 = arith.constant 0 : i32
    %c0_i32_0 = arith.constant 0 : i32
    return %arg0, %c0_i32 : i32, i32
  }
}

</mosaic_0001>

<llo_original>
// kernel: simple_policy_network.1
$region0: #{simple_policy_network.1}
  #allocation0 [shape = 'u32[]', space=smem, size = 0x4, offset = 0x4, fixed_abs, tag = 'smem constant byte address 0x4 - core index']
  #allocation1 [shape = 'u32[72,128]{1,0:T(1,128)}', space=vmem, size = 0x9000, scoped, tag = 'internal scratch']
  %s0 = inlined_call_operand.vmem [shape: bf16[2,42], index: 0, kind: input, shape index: {}]
  %s1 = inlined_call_operand.vmem [shape: bf16[42,64], index: 1, kind: input, shape index: {}]
  %s2 = inlined_call_operand.vmem [shape: f32[1,64], index: 2, kind: input, shape index: {}]
  %s3 = inlined_call_operand.vmem [shape: bf16[64,32], index: 3, kind: input, shape index: {}]
  %s4 = inlined_call_operand.vmem [shape: f32[1,32], index: 4, kind: input, shape index: {}]
  %s5 = inlined_call_operand.vmem [shape: bf16[32,7], index: 5, kind: input, shape index: {}]
  %s6 = inlined_call_operand.vmem [shape: f32[1,7], index: 6, kind: input, shape index: {}]
  %s7 = inlined_call_operand.hbm [shape: f32[2,7], index: 7, kind: output, shape index: {}]
  %s8 = sld [smem:[#allocation0]]
  $region38: #{simple_policy_network.1} parent=0
    _
  %s10 = ssub.s32 1, %s8
  %s11 = scalar_select 0, %s10, %s8
  $region1: #{simple_policy_network.1} parent=0
    #allocation2 [shape = 'u8[4096]{0}', space=vmem, size = 0x1000, scoped, tag = 'output window, operand 0, single buffered']
    #allocation3 [shape = 's32[1]{0}', space=sflag, size = 0x4, scoped, tag = 'scoped memory for simple_policy_network.1']
    %12 = vsyncpa [#allocation3], 0
    // Predicated region
    $region2: #{simple_policy_network.1} parent=1 // pred_check
      _
    $region3: #{simple_policy_network.1} parent=1 // pred_check_branch
      %14 = sbr.rel (0) target = $region5
    $region4: #{simple_policy_network.1} parent=1 // pred_region
      _
    $region5: #{simple_policy_network.1} parent=1 // pred_fallthru
      _
    // Predicated region
    $region6: #{simple_policy_network.1} parent=1 // pred_check
      _
    $region7: #{simple_policy_network.1} parent=1 // pred_check_branch
      %16 = sbr.rel (0) target = $region9
    $region8: #{simple_policy_network.1} parent=1 // pred_region
      _
    $region9: #{simple_policy_network.1} parent=1 // pred_fallthru
      _
    // Predicated region
    $region10: #{simple_policy_network.1} parent=1 // pred_check
      _
    $region11: #{simple_policy_network.1} parent=1 // pred_check_branch
      %18 = sbr.rel (0) target = $region13
    $region12: #{simple_policy_network.1} parent=1 // pred_region
      _
    $region13: #{simple_policy_network.1} parent=1 // pred_fallthru
      _
    // Predicated region
    $region14: #{simple_policy_network.1} parent=1 // pred_check
      _
    $region15: #{simple_policy_network.1} parent=1 // pred_check_branch
      %20 = sbr.rel (0) target = $region17
    $region16: #{simple_policy_network.1} parent=1 // pred_region
      _
    $region17: #{simple_policy_network.1} parent=1 // pred_fallthru
      _
    // Predicated region
    $region18: #{simple_policy_network.1} parent=1 // pred_check
      _
    $region19: #{simple_policy_network.1} parent=1 // pred_check_branch
      %22 = sbr.rel (0) target = $region21
    $region20: #{simple_policy_network.1} parent=1 // pred_region
      _
    $region21: #{simple_policy_network.1} parent=1 // pred_fallthru
      _
    // Predicated region
    $region22: #{simple_policy_network.1} parent=1 // pred_check
      _
    $region23: #{simple_policy_network.1} parent=1 // pred_check_branch
      %24 = sbr.rel (0) target = $region25
    $region24: #{simple_policy_network.1} parent=1 // pred_region
      _
    $region25: #{simple_policy_network.1} parent=1 // pred_fallthru
      _
    // Predicated region
    $region26: #{simple_policy_network.1} parent=1 // pred_check
      _
    $region27: #{simple_policy_network.1} parent=1 // pred_check_branch
      %26 = sbr.rel (0) target = $region29
    $region28: #{simple_policy_network.1} parent=1 // pred_region
      _
    $region29: #{simple_policy_network.1} parent=1 // pred_fallthru
      _
    %v28 = vld [vmem:[%s0] sm:$0x1]
    %v29 = vld [vmem:[%s0 + $0x1] sm:$0x1]
    %v30 = vld [vmem:[%s0 + $0x2] sm:$0x1]
    %v31 = vld [vmem:[%s0 + $0x3] sm:$0x1]
    %v32 = vld [vmem:[%s1] sm:$0xf]
    %v33 = vld [vmem:[%s1 + $0x4] sm:$0xf]
    %v34 = vld [vmem:[%s1 + $0x8] sm:$0xf]
    %v35 = vld [vmem:[%s1 + $0xc] sm:$0xf]
    %v36 = vld [vmem:[%s1 + $0x10] sm:$0xf]
    %v37 = vld [vmem:[%s1 + $0x14] sm:$0x1]
    %v38 = vld [vmem:[%s2] sm:$0x1]
    %v40 = vperm.slane %v38, 0
    %43 = vst [vmem:[#allocation1] ss:$9 sm:$0xff] %v28
    %s45 = scalar_lea.vmem [#allocation1], 1
    %46 = vst [vmem:[%s45] ss:$9 sm:$0xff] %v29
    %s48 = scalar_lea.vmem [#allocation1], 2
    %49 = vst [vmem:[%s48] ss:$9 sm:$0xff] %v30
    %s51 = scalar_lea.vmem [#allocation1], 3
    %52 = vst [vmem:[%s51] ss:$9 sm:$0xff] %v31
    %v53 = vld [vmem:[#allocation1] sm:$0xff]
    %v60 = vunpack.c.l.b16 %v32
    %v61 = vunpack.c.l.b16 %v33
    %v62 = vunpack.c.l.b16 %v34
    %v63 = vunpack.c.l.b16 %v35
    %v64 = vunpack.c.l.b16 %v36
    %v65 = vunpack.c.l.b16 %v37
    %v66 = vpack.c.b16 %v61, %v60
    %v67 = vpack.c.b16 %v63, %v62
    %v68 = vpack.c.b16 %v65, %v64
    %vm71 = vcmask 343040
    %v72 = vsel %vm71, %v53, 0
    %vm74 = vcmask 1044480
    %v76 = vsel %vm74, %v68, 0
    %78 = vmatpush.bf16.msra.mxu0 0
    %79 = vmatpush.bf16.msra.mxu0 0
    %80 = vmatpush.bf16.msra.mxu0 0
    %81 = vmatpush.bf16.msra.mxu0 0
    %82 = vmatpush.bf16.msra.mxu0 0
    %83 = vmatpush.bf16.msra.mxu0 %v76
    %84 = vmatpush.bf16.msra.mxu0 %v67
    %85 = vmatpush.bf16.msra.mxu0 %v66
    %86 = vmatmul.bf16.gmra.mxu0 %v72
    %v87 = vpop.f32.mrf.mxu0
    %v88 = vadd.f32 %v40, %v87
    %v89 = vpop.f32.mrf.mxu0
    %90 = vdwg.mxu0
    %v91 = vmax.f32 %v88, 0.0
    %v92 = vpack.c.bf16 %v91, %v91
    %v93 = vld [vmem:[%s3] sm:$0xf]
    %v94 = vld [vmem:[%s3 + $0x4] sm:$0xf]
    %v95 = vld [vmem:[%s3 + $0x8] sm:$0xf]
    %v96 = vld [vmem:[%s3 + $0xc] sm:$0xf]
    %v97 = vld [vmem:[%s3 + $0x10] sm:$0xf]
    %v98 = vld [vmem:[%s3 + $0x14] sm:$0xf]
    %v99 = vld [vmem:[%s3 + $0x18] sm:$0xf]
    %v100 = vld [vmem:[%s3 + $0x1c] sm:$0xf]
    %v101 = vld [vmem:[%s4] sm:$0x1]
    %v103 = vperm.slane %v101, 0
    %v113 = vunpack.c.l.b16 %v93
    %v114 = vunpack.c.l.b16 %v94
    %v115 = vunpack.c.l.b16 %v95
    %v116 = vunpack.c.l.b16 %v96
    %v117 = vunpack.c.l.b16 %v97
    %v118 = vunpack.c.l.b16 %v98
    %v119 = vunpack.c.l.b16 %v99
    %v120 = vunpack.c.l.b16 %v100
    %v121 = vpack.c.b16 %v114, %v113
    %v122 = vpack.c.b16 %v116, %v115
    %v123 = vpack.c.b16 %v118, %v117
    %v124 = vpack.c.b16 %v120, %v119
    %vm129 = vcmask 523264
    %v131 = vsel %vm129, %v92, 0
    %133 = vmatpush.bf16.msra.mxu0 0
    %134 = vmatpush.bf16.msra.mxu0 0
    %135 = vmatpush.bf16.msra.mxu0 0
    %136 = vmatpush.bf16.msra.mxu0 0
    %137 = vmatpush.bf16.msra.mxu0 %v124
    %138 = vmatpush.bf16.msra.mxu0 %v123
    %139 = vmatpush.bf16.msra.mxu0 %v122
    %140 = vmatpush.bf16.msra.mxu0 %v121
    %141 = vmatmul.bf16.gmra.mxu0 %v131
    %v142 = vpop.f32.mrf.mxu0
    %v143 = vadd.f32 %v103, %v142
    %v144 = vpop.f32.mrf.mxu0
    %145 = vdwg.mxu0
    %v146 = vmax.f32 %v143, 0.0
    %v147 = vpack.c.bf16 %v146, %v146
    %v148 = vld [vmem:[%s5] sm:$0xf]
    %v149 = vld [vmem:[%s5 + $0x4] sm:$0xf]
    %v150 = vld [vmem:[%s5 + $0x8] sm:$0xf]
    %v151 = vld [vmem:[%s5 + $0xc] sm:$0xf]
    %v152 = vld [vmem:[%s6] sm:$0x1]
    %v154 = vperm.slane %v152, 0
    %v160 = vunpack.c.l.b16 %v148
    %v161 = vunpack.c.l.b16 %v149
    %v162 = vunpack.c.l.b16 %v150
    %v163 = vunpack.c.l.b16 %v151
    %v164 = vpack.c.b16 %v161, %v160
    %v165 = vpack.c.b16 %v163, %v162
    %vm168 = vcmask 261120
    %v170 = vsel %vm168, %v147, 0
    %172 = vmatpush.bf16.msra.mxu0 0
    %173 = vmatpush.bf16.msra.mxu0 0
    %174 = vmatpush.bf16.msra.mxu0 0
    %175 = vmatpush.bf16.msra.mxu0 0
    %176 = vmatpush.bf16.msra.mxu0 0
    %177 = vmatpush.bf16.msra.mxu0 0
    %178 = vmatpush.bf16.msra.mxu0 %v165
    %179 = vmatpush.bf16.msra.mxu0 %v164
    %180 = vmatmul.bf16.gmra.mxu0 %v170
    %v181 = vpop.f32.mrf.mxu0
    %v182 = vadd.f32 %v154, %v181
    %v183 = vpop.f32.mrf.mxu0
    %184 = vdwg.mxu0
    %vm185 = vcmask 56320
    %v186 = vsel %vm185, %v182, -inf
    %187 = vmax.xlane.f32.xlu0 %v186
    %v188 = vpop.xlane.xlu0 %187
    %v189 = vsub.f32 %v182, %v188
    %v190 = vmul.f32 %v189, 1.442695
    %v191 = vpow.pop %v190
    %v192 = vsel %vm185, %v191, 0.0
    %193 = vadd.xlane.f32.xlu0 %v192
    %v194 = vpop.xlane.xlu0 %193
    %v195 = vrcp.pop %v194
    %v196 = vmul.f32 %v194, %v195
    %v197 = vsub.f32 1.0, %v196
    %v198 = vmul.f32 %v195, %v197
    %v199 = vadd.f32 %v195, %v198
    %vm200 = vweird.f32 %v194
    %vm201 = vweird.f32 %v195
    %vm202 = vmor %vm200, %vm201
    %v203 = vsel %vm202, %v195, %v199
    %v204 = vand.u32 2147483647, %v194
    %vm205 = vcmp.eq.f32.partialorder %v204, 8.507059e+37
    %v206 = vand.u32 %v194, 2147483648
    %v207 = vor.u32 1.1754944e-38, %v206
    %v208 = vsel %vm205, %v207, %v203
    %v209 = vmul.f32 %v191, %v208
    %210 = vst.msk [vmem:[#allocation2] sm:$0xff] %vm185, %v209
    // Predicated region
    $region30: #{simple_policy_network.1} parent=1 // pred_check
      _
    $region31: #{simple_policy_network.1} parent=1 // pred_check_branch
      %212 = sbr.rel (0) target = $region33
    $region32: #{simple_policy_network.1} parent=1 // pred_region
      %214 = vsyncadd [#allocation3], 96
      %s215 = sshll.u32 [#allocation2], 4
      %s216 = int_to_ptr.vmem [resolvable:$true] %s215
      %s217 = sshll.u32 %s7, 4
      %s218 = int_to_ptr.hbm [resolvable:$true] %s217
      %223 = dma.vmem_to_hbm [thread:$0]  %s216, 32, %s218, [#allocation3], 32, 32, 2
    $region33: #{simple_policy_network.1} parent=1 // pred_fallthru
      _
    // Predicated region
    $region34: #{simple_policy_network.1} parent=1 // pred_check
      _
    $region35: #{simple_policy_network.1} parent=1 // pred_check_branch
      %225 = sbr.rel (0) target = $region37
    $region36: #{simple_policy_network.1} parent=1 // pred_region
      %227 = dma.done [#allocation3], 128
    $region37: #{simple_policy_network.1} parent=1 // pred_fallthru
      _
    %228 = vsyncpa [#allocation3], 1

</llo_original>
